<compile_context>
chip_gen: v5e
topology: v5e:2x2
jax: 0.10.0
libtpu: 0.0.40
codegen_flags: <defaults>
</compile_context>

<pallas_src>
import jax
import jax.numpy as jnp
from jax import lax
from jax.experimental import pallas as pl
from jax.experimental.pallas import tpu as pltpu


# ----------------------------- Pallas kernel ---------------------------------
def cnet_mlp_kernel(x_ref, w1_ref, b1_ref, w2_ref, b2_ref, w3_ref, b3_ref, out_ref):
    """One batch tile.

    x_ref  : (TB, S)     int32 tile indices            (streamed per grid step)
    w1_ref : (S*V, H1)   Embedding folded into Linear1 (resident, MXU dtype)
    b1_ref : (1, H1)     f32                           (resident)
    w2_ref : (H1, H2)    MXU dtype                     (resident)
    b2_ref : (1, H2)     f32                           (resident)
    w3_ref : (H2, 128)   MXU dtype, lane-padded head   (resident)
    b3_ref : (1, 128)    f32, lane-padded              (resident)
    out_ref: (TB, 128)   f32, lane-dense stores; real outputs live in [:, :n_out]
    """
    tb, s = x_ref.shape
    kv = w1_ref.shape[0]
    v = kv // s
    mxu_dtype = w1_ref.dtype

    idx = x_ref[...]                                        # (TB, S) int32
    col = lax.broadcasted_iota(jnp.int32, (tb, kv), 1)      # lane index over S*V

    # one_hot[b, si*V + idx[b, si]] = 1  == the nn.Embedding gather + nn.Flatten,
    # expressed as a matmul against the embedding table folded into Linear1.
    one = jnp.ones((), dtype=mxu_dtype)
    zero = jnp.zeros((), dtype=mxu_dtype)
    onehot = jnp.zeros((tb, kv), dtype=mxu_dtype)
    for si in range(s):                                     # S == 8, static unroll
        tgt = idx[:, si:si + 1] + si * v                    # (TB, 1)
        onehot = onehot + jnp.where(col == tgt, one, zero)

    h = jnp.dot(onehot, w1_ref[...], preferred_element_type=jnp.float32) + b1_ref[...]
    h = jnp.maximum(h, 0.0).astype(w2_ref.dtype)
    h = jnp.dot(h, w2_ref[...], preferred_element_type=jnp.float32) + b2_ref[...]
    h = jnp.maximum(h, 0.0).astype(w3_ref.dtype)
    logits = jnp.dot(h, w3_ref[...], preferred_element_type=jnp.float32) + b3_ref[...]
    # Sigmoid: exp on the EUP; approx reciprocal also on the EUP (free slots).
    out_ref[...] = pl.reciprocal(1.0 + jnp.exp(-logits), approx=True)


# ------------------------------- wrapper --------------------------------------
def cnet_forward(x, params, *, tb=256, use_bf16=False):
    """x: (B, 8) int32 tile indices in [0, n_tile_types]."""
    emb, w1, b1, w2, b2, w3, b3 = params
    B, S = x.shape
    V, E = emb.shape
    H1 = w1.shape[1]
    n_out = w3.shape[1]

    mxu_dtype = jnp.bfloat16 if use_bf16 else jnp.float32

    # Fold nn.Embedding + nn.Flatten into the first Linear (both linear, no
    # nonlinearity in between): W1_fold[s*V + v, j] = sum_e emb[v, e] * w1[s*E + e, j]
    w1_fold = jnp.einsum(
        "ve,sej->svj", emb, w1.reshape(S, E, H1), precision=lax.Precision.HIGHEST
    ).reshape(S * V, H1)

    # Lane-pad the output head to a multiple of 128 columns (lane-dense stores).
    n_out_p = pl.cdiv(n_out, 128) * 128
    w3_p = jnp.pad(w3, ((0, 0), (0, n_out_p - n_out)))
    b3_p = jnp.pad(b3, ((0, 0), (0, n_out_p - n_out)))

    # Batch tiling (TB multiple of 8; pad batch to a multiple of TB).
    tb = max(8, (min(tb, pl.cdiv(B, 8) * 8) // 8) * 8)
    Bp = pl.cdiv(B, tb) * tb
    xp = x if Bp == B else jnp.pad(x, ((0, Bp - B), (0, 0)))

    w1_k = w1_fold.astype(mxu_dtype)
    w2_k = w2.astype(mxu_dtype)
    w3_k = w3_p.astype(mxu_dtype)

    def tiled(shape):
        return pl.BlockSpec(shape, lambda i: (i, 0))          # new block per grid step

    def resident(shape):
        return pl.BlockSpec(shape, lambda i: (0, 0))           # fetched once, stays in VMEM

    out_p = pl.pallas_call(
        cnet_mlp_kernel,
        out_shape=jax.ShapeDtypeStruct((Bp, n_out_p), jnp.float32),
        grid=(Bp // tb,),
        in_specs=[
            tiled((tb, S)),
            resident(w1_k.shape), resident(b1.shape),
            resident(w2_k.shape), resident(b2.shape),
            resident(w3_k.shape), resident(b3_p.shape),
        ],
        out_specs=tiled((tb, n_out_p)),
        compiler_params=pltpu.CompilerParams(dimension_semantics=("parallel",)),
    )(xp, w1_k, b1, w2_k, b2, w3_k, b3_p)

    return out_p[:B, :n_out]


# --------------------------- deterministic params ------------------------------
def init_params(key, n_tile_types, emb_dim=6, layers=(32, 32)):
    dims = [emb_dim * 8, *layers, n_tile_types]
    keys = jax.random.split(key, 1 + 2 * (len(dims) - 1))
    # nn.Embedding default init: N(0, 1)
    emb = jax.random.normal(keys[0], (n_tile_types + 1, emb_dim), dtype=jnp.float32)
    params = [emb]
    k = 1
    for i in range(len(dims) - 1):
        fan_in, fan_out = dims[i], dims[i + 1]
        bound = 1.0 / jnp.sqrt(jnp.float32(fan_in))
        # store weights as (in, out) so the kernel computes x @ W (== PyTorch x @ W.T)
        w = jax.random.uniform(keys[k], (fan_in, fan_out), jnp.float32, -bound, bound)
        b = jax.random.uniform(keys[k + 1], (1, fan_out), jnp.float32, -bound, bound)
        params += [w, b]
        k += 2
    return tuple(params)


# ------------------------------ reference -------------------------------------
def cnet_reference(x, params):
    emb, w1, b1, w2, b2, w3, b3 = params
    B, S = x.shape
    hp = lax.Precision.HIGHEST
    h = jnp.take(emb, x, axis=0).reshape(B, -1)
    h = jnp.maximum(jnp.dot(h, w1, precision=hp) + b1, 0.0)
    h = jnp.maximum(jnp.dot(h, w2, precision=hp) + b2, 0.0)
    return jax.nn.sigmoid(jnp.dot(h, w3, precision=hp) + b3)


if __name__ == "__main__":
    n_tile_types = 10
    B, S = 128, 8  # Flatten after embedding implies 8 tokens per example (emb_dim * 8)

    key = jax.random.PRNGKey(0)
    k_param, k_x = jax.random.split(key)
    params = init_params(k_param, n_tile_types)
    x = jax.random.randint(k_x, (B, S), 0, n_tile_types + 1, dtype=jnp.int32)

    ref = cnet_reference(x, params)

    # f32 MXU path. Small tolerance slack: the Embedding+Linear1 contraction is
    # reassociated (folded) and the sigmoid uses the approx EUP reciprocal.
    out = jax.block_until_ready(cnet_forward(x, params, tb=32, use_bf16=False))
    assert out.shape == (B, n_tile_types)
    assert jnp.allclose(out, ref, atol=5e-3, rtol=5e-3), float(jnp.max(jnp.abs(out - ref)))

    # bf16 MXU path (fast path on v5e/v6e/v7x): f32 accumulate + f32 elementwise.
    out_bf16 = jax.block_until_ready(cnet_forward(x, params, tb=32, use_bf16=True))
    assert out_bf16.shape == (B, n_tile_types)
    assert jnp.allclose(out_bf16, ref, atol=3e-2, rtol=3e-2), float(jnp.max(jnp.abs(out_bf16 - ref)))

    print("KERNEL_OK")
</pallas_src>

<mosaic_0001>
module attributes {stable_mosaic.version = 11 : i64} {
  func.func @cnet_mlp_kernel(%arg0: i32, %arg1: memref<32x8xi32, #tpu.memory_space<vmem>>, %arg2: memref<88x32xf32, #tpu.memory_space<vmem>>, %arg3: memref<1x32xf32, #tpu.memory_space<vmem>>, %arg4: memref<32x32xf32, #tpu.memory_space<vmem>>, %arg5: memref<1x32xf32, #tpu.memory_space<vmem>>, %arg6: memref<32x128xf32, #tpu.memory_space<vmem>>, %arg7: memref<1x128xf32, #tpu.memory_space<vmem>>, %arg8: memref<32x128xf32, #tpu.memory_space<vmem>>) attributes {dimension_semantics = [#tpu.dimension_semantics<parallel>], iteration_bounds = array<i64: 4>, scalar_prefetch = 0 : i64, scratch_operands = 0 : i64, tpu.core_type = #tpu.core_type<tc>, window_params = [{transform_indices = @transform_0, window_bounds = array<i64: 32, 8>}, {pipeline_mode = #tpu.pipeline_mode<synchronous>, transform_indices = @transform_1, window_bounds = array<i64: 88, 32>}, {pipeline_mode = #tpu.pipeline_mode<synchronous>, transform_indices = @transform_2, window_bounds = array<i64: 1, 32>}, {pipeline_mode = #tpu.pipeline_mode<synchronous>, transform_indices = @transform_3, window_bounds = array<i64: 32, 32>}, {pipeline_mode = #tpu.pipeline_mode<synchronous>, transform_indices = @transform_4, window_bounds = array<i64: 1, 32>}, {pipeline_mode = #tpu.pipeline_mode<synchronous>, transform_indices = @transform_5, window_bounds = array<i64: 32, 128>}, {pipeline_mode = #tpu.pipeline_mode<synchronous>, transform_indices = @transform_6, window_bounds = array<i64: 1, 128>}, {transform_indices = @transform_7, window_bounds = array<i64: 32, 128>}]} {
    %c0 = arith.constant 0 : index
    %c0_0 = arith.constant 0 : index
    %0 = vector.load %arg1[%c0, %c0_0] : memref<32x8xi32, #tpu.memory_space<vmem>>, vector<32x8xi32>
    %1 = tpu.iota {dimensions = array<i32: 1>} : vector<32x88xi32>
    %cst = arith.constant 0.000000e+00 : f32
    %2 = vector.broadcast %cst : f32 to vector<32x88xf32>
    %3 = vector.extract_strided_slice %0 {offsets = [0, 0], sizes = [32, 1], strides = [1, 1]} : vector<32x8xi32> to vector<32x1xi32>
    %c0_i32 = arith.constant 0 : i32
    %4 = vector.broadcast %c0_i32 : i32 to vector<32x1xi32>
    %5 = arith.addi %3, %4 : vector<32x1xi32>
    %6 = vector.broadcast %5 : vector<32x1xi32> to vector<32x88xi32>
    %7 = arith.cmpi eq, %1, %6 : vector<32x88xi32>
    %cst_1 = arith.constant 1.000000e+00 : f32
    %cst_2 = arith.constant 0.000000e+00 : f32
    %8 = vector.broadcast %cst_1 : f32 to vector<32x88xf32>
    %9 = vector.broadcast %cst_2 : f32 to vector<32x88xf32>
    %10 = arith.select %7, %8, %9 : vector<32x88xi1>, vector<32x88xf32>
    %11 = arith.addf %2, %10 : vector<32x88xf32>
    %12 = vector.extract_strided_slice %0 {offsets = [0, 1], sizes = [32, 1], strides = [1, 1]} : vector<32x8xi32> to vector<32x1xi32>
    %c11_i32 = arith.constant 11 : i32
    %13 = vector.broadcast %c11_i32 : i32 to vector<32x1xi32>
    %14 = arith.addi %12, %13 : vector<32x1xi32>
    %15 = vector.broadcast %14 : vector<32x1xi32> to vector<32x88xi32>
    %16 = arith.cmpi eq, %1, %15 : vector<32x88xi32>
    %cst_3 = arith.constant 1.000000e+00 : f32
    %cst_4 = arith.constant 0.000000e+00 : f32
    %17 = vector.broadcast %cst_3 : f32 to vector<32x88xf32>
    %18 = vector.broadcast %cst_4 : f32 to vector<32x88xf32>
    %19 = arith.select %16, %17, %18 : vector<32x88xi1>, vector<32x88xf32>
    %20 = arith.addf %11, %19 : vector<32x88xf32>
    %21 = vector.extract_strided_slice %0 {offsets = [0, 2], sizes = [32, 1], strides = [1, 1]} : vector<32x8xi32> to vector<32x1xi32>
    %c22_i32 = arith.constant 22 : i32
    %22 = vector.broadcast %c22_i32 : i32 to vector<32x1xi32>
    %23 = arith.addi %21, %22 : vector<32x1xi32>
    %24 = vector.broadcast %23 : vector<32x1xi32> to vector<32x88xi32>
    %25 = arith.cmpi eq, %1, %24 : vector<32x88xi32>
    %cst_5 = arith.constant 1.000000e+00 : f32
    %cst_6 = arith.constant 0.000000e+00 : f32
    %26 = vector.broadcast %cst_5 : f32 to vector<32x88xf32>
    %27 = vector.broadcast %cst_6 : f32 to vector<32x88xf32>
    %28 = arith.select %25, %26, %27 : vector<32x88xi1>, vector<32x88xf32>
    %29 = arith.addf %20, %28 : vector<32x88xf32>
    %30 = vector.extract_strided_slice %0 {offsets = [0, 3], sizes = [32, 1], strides = [1, 1]} : vector<32x8xi32> to vector<32x1xi32>
    %c33_i32 = arith.constant 33 : i32
    %31 = vector.broadcast %c33_i32 : i32 to vector<32x1xi32>
    %32 = arith.addi %30, %31 : vector<32x1xi32>
    %33 = vector.broadcast %32 : vector<32x1xi32> to vector<32x88xi32>
    %34 = arith.cmpi eq, %1, %33 : vector<32x88xi32>
    %cst_7 = arith.constant 1.000000e+00 : f32
    %cst_8 = arith.constant 0.000000e+00 : f32
    %35 = vector.broadcast %cst_7 : f32 to vector<32x88xf32>
    %36 = vector.broadcast %cst_8 : f32 to vector<32x88xf32>
    %37 = arith.select %34, %35, %36 : vector<32x88xi1>, vector<32x88xf32>
    %38 = arith.addf %29, %37 : vector<32x88xf32>
    %39 = vector.extract_strided_slice %0 {offsets = [0, 4], sizes = [32, 1], strides = [1, 1]} : vector<32x8xi32> to vector<32x1xi32>
    %c44_i32 = arith.constant 44 : i32
    %40 = vector.broadcast %c44_i32 : i32 to vector<32x1xi32>
    %41 = arith.addi %39, %40 : vector<32x1xi32>
    %42 = vector.broadcast %41 : vector<32x1xi32> to vector<32x88xi32>
    %43 = arith.cmpi eq, %1, %42 : vector<32x88xi32>
    %cst_9 = arith.constant 1.000000e+00 : f32
    %cst_10 = arith.constant 0.000000e+00 : f32
    %44 = vector.broadcast %cst_9 : f32 to vector<32x88xf32>
    %45 = vector.broadcast %cst_10 : f32 to vector<32x88xf32>
    %46 = arith.select %43, %44, %45 : vector<32x88xi1>, vector<32x88xf32>
    %47 = arith.addf %38, %46 : vector<32x88xf32>
    %48 = vector.extract_strided_slice %0 {offsets = [0, 5], sizes = [32, 1], strides = [1, 1]} : vector<32x8xi32> to vector<32x1xi32>
    %c55_i32 = arith.constant 55 : i32
    %49 = vector.broadcast %c55_i32 : i32 to vector<32x1xi32>
    %50 = arith.addi %48, %49 : vector<32x1xi32>
    %51 = vector.broadcast %50 : vector<32x1xi32> to vector<32x88xi32>
    %52 = arith.cmpi eq, %1, %51 : vector<32x88xi32>
    %cst_11 = arith.constant 1.000000e+00 : f32
    %cst_12 = arith.constant 0.000000e+00 : f32
    %53 = vector.broadcast %cst_11 : f32 to vector<32x88xf32>
    %54 = vector.broadcast %cst_12 : f32 to vector<32x88xf32>
    %55 = arith.select %52, %53, %54 : vector<32x88xi1>, vector<32x88xf32>
    %56 = arith.addf %47, %55 : vector<32x88xf32>
    %57 = vector.extract_strided_slice %0 {offsets = [0, 6], sizes = [32, 1], strides = [1, 1]} : vector<32x8xi32> to vector<32x1xi32>
    %c66_i32 = arith.constant 66 : i32
    %58 = vector.broadcast %c66_i32 : i32 to vector<32x1xi32>
    %59 = arith.addi %57, %58 : vector<32x1xi32>
    %60 = vector.broadcast %59 : vector<32x1xi32> to vector<32x88xi32>
    %61 = arith.cmpi eq, %1, %60 : vector<32x88xi32>
    %cst_13 = arith.constant 1.000000e+00 : f32
    %cst_14 = arith.constant 0.000000e+00 : f32
    %62 = vector.broadcast %cst_13 : f32 to vector<32x88xf32>
    %63 = vector.broadcast %cst_14 : f32 to vector<32x88xf32>
    %64 = arith.select %61, %62, %63 : vector<32x88xi1>, vector<32x88xf32>
    %65 = arith.addf %56, %64 : vector<32x88xf32>
    %66 = vector.extract_strided_slice %0 {offsets = [0, 7], sizes = [32, 1], strides = [1, 1]} : vector<32x8xi32> to vector<32x1xi32>
    %c77_i32 = arith.constant 77 : i32
    %67 = vector.broadcast %c77_i32 : i32 to vector<32x1xi32>
    %68 = arith.addi %66, %67 : vector<32x1xi32>
    %69 = vector.broadcast %68 : vector<32x1xi32> to vector<32x88xi32>
    %70 = arith.cmpi eq, %1, %69 : vector<32x88xi32>
    %cst_15 = arith.constant 1.000000e+00 : f32
    %cst_16 = arith.constant 0.000000e+00 : f32
    %71 = vector.broadcast %cst_15 : f32 to vector<32x88xf32>
    %72 = vector.broadcast %cst_16 : f32 to vector<32x88xf32>
    %73 = arith.select %70, %71, %72 : vector<32x88xi1>, vector<32x88xf32>
    %74 = arith.addf %65, %73 : vector<32x88xf32>
    %c0_17 = arith.constant 0 : index
    %c0_18 = arith.constant 0 : index
    %75 = vector.load %arg2[%c0_17, %c0_18] : memref<88x32xf32, #tpu.memory_space<vmem>>, vector<88x32xf32>
    %cst_19 = arith.constant dense<0.000000e+00> : vector<32x32xf32>
    %76 = tpu.matmul %74, %75, %cst_19 {dimension_numbers = #tpu.dot_dimension_numbers<[1], [0], [0], [1], [0, 0, 1, 1], [], []>} : vector<32x88xf32>, vector<88x32xf32>, vector<32x32xf32> -> vector<32x32xf32>
    %c0_20 = arith.constant 0 : index
    %c0_21 = arith.constant 0 : index
    %77 = vector.load %arg3[%c0_20, %c0_21] : memref<1x32xf32, #tpu.memory_space<vmem>>, vector<1x32xf32>
    %78 = vector.broadcast %77 : vector<1x32xf32> to vector<32x32xf32>
    %79 = arith.addf %76, %78 : vector<32x32xf32>
    %cst_22 = arith.constant 0.000000e+00 : f32
    %80 = vector.broadcast %cst_22 : f32 to vector<32x32xf32>
    %81 = arith.maximumf %79, %80 : vector<32x32xf32>
    %c0_23 = arith.constant 0 : index
    %c0_24 = arith.constant 0 : index
    %82 = vector.load %arg4[%c0_23, %c0_24] : memref<32x32xf32, #tpu.memory_space<vmem>>, vector<32x32xf32>
    %cst_25 = arith.constant dense<0.000000e+00> : vector<32x32xf32>
    %83 = tpu.matmul %81, %82, %cst_25 {dimension_numbers = #tpu.dot_dimension_numbers<[1], [0], [0], [1], [0, 0, 1, 1], [], []>} : vector<32x32xf32>, vector<32x32xf32>, vector<32x32xf32> -> vector<32x32xf32>
    %c0_26 = arith.constant 0 : index
    %c0_27 = arith.constant 0 : index
    %84 = vector.load %arg5[%c0_26, %c0_27] : memref<1x32xf32, #tpu.memory_space<vmem>>, vector<1x32xf32>
    %85 = vector.broadcast %84 : vector<1x32xf32> to vector<32x32xf32>
    %86 = arith.addf %83, %85 : vector<32x32xf32>
    %cst_28 = arith.constant 0.000000e+00 : f32
    %87 = vector.broadcast %cst_28 : f32 to vector<32x32xf32>
    %88 = arith.maximumf %86, %87 : vector<32x32xf32>
    %c0_29 = arith.constant 0 : index
    %c0_30 = arith.constant 0 : index
    %89 = vector.load %arg6[%c0_29, %c0_30] : memref<32x128xf32, #tpu.memory_space<vmem>>, vector<32x128xf32>
    %cst_31 = arith.constant dense<0.000000e+00> : vector<32x128xf32>
    %90 = tpu.matmul %88, %89, %cst_31 {dimension_numbers = #tpu.dot_dimension_numbers<[1], [0], [0], [1], [0, 0, 1, 1], [], []>} : vector<32x32xf32>, vector<32x128xf32>, vector<32x128xf32> -> vector<32x128xf32>
    %c0_32 = arith.constant 0 : index
    %c0_33 = arith.constant 0 : index
    %91 = vector.load %arg7[%c0_32, %c0_33] : memref<1x128xf32, #tpu.memory_space<vmem>>, vector<1x128xf32>
    %92 = vector.broadcast %91 : vector<1x128xf32> to vector<32x128xf32>
    %93 = arith.addf %90, %92 : vector<32x128xf32>
    %cst_34 = arith.constant 0.000000e+00 : f32
    %94 = vector.broadcast %cst_34 : f32 to vector<32x128xf32>
    %95 = arith.subf %94, %93 : vector<32x128xf32>
    %96 = math.exp %95 : vector<32x128xf32>
    %cst_35 = arith.constant 1.000000e+00 : f32
    %97 = vector.broadcast %cst_35 : f32 to vector<32x128xf32>
    %98 = arith.addf %97, %96 : vector<32x128xf32>
    %99 = tpu.reciprocal %98 {approx = true} : vector<32x128xf32> -> vector<32x128xf32>
    %c0_36 = arith.constant 0 : index
    %c0_37 = arith.constant 0 : index
    %100 = vector.load %arg8[%c0_36, %c0_37] : memref<32x128xf32, #tpu.memory_space<vmem>>, vector<32x128xf32>
    tpu.vector_store %arg8[%c0_36, %c0_37], %99 {strides = array<i32>} : memref<32x128xf32, #tpu.memory_space<vmem>>, vector<32x128xf32>,
    return
  }
  func.func @transform_0(%arg0: i32) -> (i32, i32) {
    %c0_i32 = arith.constant 0 : i32
    %c0_i32_0 = arith.constant 0 : i32
    return %arg0, %c0_i32 : i32, i32
  }
  func.func @transform_1(%arg0: i32) -> (i32, i32) {
    %c0_i32 = arith.constant 0 : i32
    %c0_i32_0 = arith.constant 0 : i32
    %c0_i32_1 = arith.constant 0 : i32
    return %c0_i32, %c0_i32_0 : i32, i32
  }
  func.func @transform_2(%arg0: i32) -> (i32, i32) {
    %c0_i32 = arith.constant 0 : i32
    %c0_i32_0 = arith.constant 0 : i32
    %c0_i32_1 = arith.constant 0 : i32
    return %c0_i32, %c0_i32_0 : i32, i32
  }
  func.func @transform_3(%arg0: i32) -> (i32, i32) {
    %c0_i32 = arith.constant 0 : i32
    %c0_i32_0 = arith.constant 0 : i32
    %c0_i32_1 = arith.constant 0 : i32
    return %c0_i32, %c0_i32_0 : i32, i32
  }
  func.func @transform_4(%arg0: i32) -> (i32, i32) {
    %c0_i32 = arith.constant 0 : i32
    %c0_i32_0 = arith.constant 0 : i32
    %c0_i32_1 = arith.constant 0 : i32
    return %c0_i32, %c0_i32_0 : i32, i32
  }
  func.func @transform_5(%arg0: i32) -> (i32, i32) {
    %c0_i32 = arith.constant 0 : i32
    %c0_i32_0 = arith.constant 0 : i32
    %c0_i32_1 = arith.constant 0 : i32
    return %c0_i32, %c0_i32_0 : i32, i32
  }
  func.func @transform_6(%arg0: i32) -> (i32, i32) {
    %c0_i32 = arith.constant 0 : i32
    %c0_i32_0 = arith.constant 0 : i32
    %c0_i32_1 = arith.constant 0 : i32
    return %c0_i32, %c0_i32_0 : i32, i32
  }
  func.func @transform_7(%arg0: i32) -> (i32, i32) {
    %c0_i32 = arith.constant 0 : i32
    %c0_i32_0 = arith.constant 0 : i32
    return %arg0, %c0_i32 : i32, i32
  }
}

</mosaic_0001>

<llo_original>
// kernel: tpu_custom_call.1
$region0: #{tpu_custom_call.1}
  #allocation0 [shape = 'u32[]', space=smem, size = 0x4, offset = 0x4, fixed_abs, tag = 'smem constant byte address 0x4 - core index']
  #allocation1 [shape = 'u32[72,128]{1,0:T(1,128)}', space=vmem, size = 0x9000, scoped, tag = 'internal scratch']
  %s0 = inlined_call_operand.vmem [shape: s32[128,8], index: 0, kind: input, shape index: {}]
  %s1 = inlined_call_operand.vmem [shape: f32[88,32], index: 1, kind: input, shape index: {}]
  %s2 = inlined_call_operand.vmem [shape: f32[1,32], index: 2, kind: input, shape index: {}]
  %s3 = inlined_call_operand.vmem [shape: f32[32,32], index: 3, kind: input, shape index: {}]
  %s4 = inlined_call_operand.vmem [shape: f32[1,32], index: 4, kind: input, shape index: {}]
  %s5 = inlined_call_operand.vmem [shape: f32[32,128], index: 5, kind: input, shape index: {}]
  %s6 = inlined_call_operand.vmem [shape: f32[1,128], index: 6, kind: input, shape index: {}]
  %s7 = inlined_call_operand.hbm [shape: f32[128,128], index: 7, kind: output, shape index: {}]
  %s8 = sld [smem:[#allocation0]]
  $region61: #{tpu_custom_call.1} parent=0
    _
  %s10 = ssub.s32 1, %s8
  %s11 = scalar_select 0, %s10, %s8
  $region1: #{tpu_custom_call.1} parent=0
    #allocation2 [shape = 'u8[32768]{0}', space=vmem, size = 0x8000, scoped, tag = 'output window, operand 0']
    #allocation3 [shape = 's32[2]{0}', space=sflag, size = 0x8, scoped, tag = 'scoped memory for tpu_custom_call.1']
    %12 = vsyncpa [#allocation3], 0
    %s13 = scalar_lea.sflag [#allocation3], 1
    %14 = vsyncpa %s13, 0
    loop: start=0, step=1, limit=6
    $region2: #{tpu_custom_call.1} parent=1 // loop_pre_header
      _
    $region3: #{tpu_custom_call.1} parent=1 // loop_header
      %s16 = sphi 0, %s20
      %p17 = scmp.ge.s32.totalorder %s16, 6
      %s26 = sphi 0, %s28
      %s29 = sphi 0, %s26
      %s30 = sphi 0, %s29
      %s46 = sphi 0, %s30
      %s50 = sphi 0, %s50
      %s52 = sphi 0, %s50
      %s53 = sphi 0, %s52
      %s67 = sphi 0, %s53
      %s71 = sphi 0, %s71
      %s73 = sphi 0, %s71
      %s74 = sphi 0, %s73
      %s88 = sphi 0, %s74
      %s92 = sphi 0, %s92
      %s94 = sphi 0, %s92
      %s95 = sphi 0, %s94
      %s109 = sphi 0, %s95
      %s113 = sphi 0, %s113
      %s115 = sphi 0, %s113
      %s116 = sphi 0, %s115
      %s130 = sphi 0, %s116
      %s134 = sphi 0, %s134
      %s136 = sphi 0, %s134
      %s137 = sphi 0, %s136
      %s151 = sphi 0, %s137
      %s155 = sphi 0, %s155
      %s157 = sphi 0, %s155
      %s158 = sphi 0, %s157
      %s172 = sphi 0, %s158
      %s178 = sphi 0, %s180
      %s181 = sphi 0, %s178
      %s182 = sphi 0, %s181
      %s198 = sphi 0, %s182
    $region4: #{tpu_custom_call.1} parent=1 // loop_header_branch
      %19 = sbr.rel (%p17) target = $region8
    $region5: #{tpu_custom_call.1} parent=1 // loop_body
      %s21 = ssub.s32 %s16, 1
      %s22 = ssub.s32 %s16, 2
      %s23 = sadd.s32 %s16, 1
      %s24 = ssub.s32 %s16, %s23
      %p25 = scmp.eq.s32.totalorder %s24, 0
      %s27 = sadd.s32 %s26, 1
      %s28 = scalar_select %p25, %s26, %s27
      %p31 = pneg %p25
      %p32 = scmp.eq.s32.totalorder %s16, 3
      %p33 = por %p31, %p32
      %p34 = scmp.ne.s32.totalorder %s26, %s29
      %p35 = scmp.eq.s32.totalorder %s16, 0
      %p36 = por %p34, %p35
      %p37 = scmp.ne.s32.totalorder %s26, %s29
      %p38 = scmp.eq.s32.totalorder %s21, 3
      %p39 = por %p37, %p38
      %p40 = scmp.ne.s32.totalorder %s29, %s30
      %p41 = scmp.eq.s32.totalorder %s21, 0
      %p42 = por %p40, %p41
      %p43 = scmp.ne.s32.totalorder %s29, %s30
      %p44 = scmp.eq.s32.totalorder %s22, 3
      %p45 = por %p43, %p44
      %p47 = scmp.ne.s32.totalorder %s30, %s46
      %p48 = scmp.eq.s32.totalorder %s22, 0
      %p49 = por %p47, %p48
      %s51 = sadd.s32 %s50, 1
      %p54 = scmp.eq.s32.totalorder %s16, 3
      %p55 = scmp.ne.s32.totalorder %s50, %s52
      %p56 = scmp.eq.s32.totalorder %s16, 0
      %p57 = por %p55, %p56
      %p58 = scmp.ne.s32.totalorder %s50, %s52
      %p59 = scmp.eq.s32.totalorder %s21, 3
      %p60 = por %p58, %p59
      %p61 = scmp.ne.s32.totalorder %s52, %s53
      %p62 = scmp.eq.s32.totalorder %s21, 0
      %p63 = por %p61, %p62
      %p64 = scmp.ne.s32.totalorder %s52, %s53
      %p65 = scmp.eq.s32.totalorder %s22, 3
      %p66 = por %p64, %p65
      %p68 = scmp.ne.s32.totalorder %s53, %s67
      %p69 = scmp.eq.s32.totalorder %s22, 0
      %p70 = por %p68, %p69
      %s72 = sadd.s32 %s71, 1
      %p75 = scmp.eq.s32.totalorder %s16, 3
      %p76 = scmp.ne.s32.totalorder %s71, %s73
      %p77 = scmp.eq.s32.totalorder %s16, 0
      %p78 = por %p76, %p77
      %p79 = scmp.ne.s32.totalorder %s71, %s73
      %p80 = scmp.eq.s32.totalorder %s21, 3
      %p81 = por %p79, %p80
      %p82 = scmp.ne.s32.totalorder %s73, %s74
      %p83 = scmp.eq.s32.totalorder %s21, 0
      %p84 = por %p82, %p83
      %p85 = scmp.ne.s32.totalorder %s73, %s74
      %p86 = scmp.eq.s32.totalorder %s22, 3
      %p87 = por %p85, %p86
      %p89 = scmp.ne.s32.totalorder %s74, %s88
      %p90 = scmp.eq.s32.totalorder %s22, 0
      %p91 = por %p89, %p90
      %s93 = sadd.s32 %s92, 1
      %p96 = scmp.eq.s32.totalorder %s16, 3
      %p97 = scmp.ne.s32.totalorder %s92, %s94
      %p98 = scmp.eq.s32.totalorder %s16, 0
      %p99 = por %p97, %p98
      %p100 = scmp.ne.s32.totalorder %s92, %s94
      %p101 = scmp.eq.s32.totalorder %s21, 3
      %p102 = por %p100, %p101
      %p103 = scmp.ne.s32.totalorder %s94, %s95
      %p104 = scmp.eq.s32.totalorder %s21, 0
      %p105 = por %p103, %p104
      %p106 = scmp.ne.s32.totalorder %s94, %s95
      %p107 = scmp.eq.s32.totalorder %s22, 3
      %p108 = por %p106, %p107
      %p110 = scmp.ne.s32.totalorder %s95, %s109
      %p111 = scmp.eq.s32.totalorder %s22, 0
      %p112 = por %p110, %p111
      %s114 = sadd.s32 %s113, 1
      %p117 = scmp.eq.s32.totalorder %s16, 3
      %p118 = scmp.ne.s32.totalorder %s113, %s115
      %p119 = scmp.eq.s32.totalorder %s16, 0
      %p120 = por %p118, %p119
      %p121 = scmp.ne.s32.totalorder %s113, %s115
      %p122 = scmp.eq.s32.totalorder %s21, 3
      %p123 = por %p121, %p122
      %p124 = scmp.ne.s32.totalorder %s115, %s116
      %p125 = scmp.eq.s32.totalorder %s21, 0
      %p126 = por %p124, %p125
      %p127 = scmp.ne.s32.totalorder %s115, %s116
      %p128 = scmp.eq.s32.totalorder %s22, 3
      %p129 = por %p127, %p128
      %p131 = scmp.ne.s32.totalorder %s116, %s130
      %p132 = scmp.eq.s32.totalorder %s22, 0
      %p133 = por %p131, %p132
      %s135 = sadd.s32 %s134, 1
      %p138 = scmp.eq.s32.totalorder %s16, 3
      %p139 = scmp.ne.s32.totalorder %s134, %s136
      %p140 = scmp.eq.s32.totalorder %s16, 0
      %p141 = por %p139, %p140
      %p142 = scmp.ne.s32.totalorder %s134, %s136
      %p143 = scmp.eq.s32.totalorder %s21, 3
      %p144 = por %p142, %p143
      %p145 = scmp.ne.s32.totalorder %s136, %s137
      %p146 = scmp.eq.s32.totalorder %s21, 0
      %p147 = por %p145, %p146
      %p148 = scmp.ne.s32.totalorder %s136, %s137
      %p149 = scmp.eq.s32.totalorder %s22, 3
      %p150 = por %p148, %p149
      %p152 = scmp.ne.s32.totalorder %s137, %s151
      %p153 = scmp.eq.s32.totalorder %s22, 0
      %p154 = por %p152, %p153
      %s156 = sadd.s32 %s155, 1
      %p159 = scmp.eq.s32.totalorder %s16, 3
      %p160 = scmp.ne.s32.totalorder %s155, %s157
      %p161 = scmp.eq.s32.totalorder %s16, 0
      %p162 = por %p160, %p161
      %p163 = scmp.ne.s32.totalorder %s155, %s157
      %p164 = scmp.eq.s32.totalorder %s21, 3
      %p165 = por %p163, %p164
      %p166 = scmp.ne.s32.totalorder %s157, %s158
      %p167 = scmp.eq.s32.totalorder %s21, 0
      %p168 = por %p166, %p167
      %p169 = scmp.ne.s32.totalorder %s157, %s158
      %p170 = scmp.eq.s32.totalorder %s22, 3
      %p171 = por %p169, %p170
      %p173 = scmp.ne.s32.totalorder %s158, %s172
      %p174 = scmp.eq.s32.totalorder %s22, 0
      %p175 = por %p173, %p174
      %s176 = ssub.s32 %s16, %s23
      %p177 = scmp.eq.s32.totalorder %s176, 0
      %s179 = sadd.s32 %s178, 1
      %s180 = scalar_select %p177, %s178, %s179
      %p183 = pneg %p177
      %p184 = scmp.eq.s32.totalorder %s16, 3
      %p185 = por %p183, %p184
      %p186 = scmp.ne.s32.totalorder %s178, %s181
      %p187 = scmp.eq.s32.totalorder %s16, 0
      %p188 = por %p186, %p187
      %p189 = scmp.ne.s32.totalorder %s178, %s181
      %p190 = scmp.eq.s32.totalorder %s21, 3
      %p191 = por %p189, %p190
      %p192 = scmp.ne.s32.totalorder %s181, %s182
      %p193 = scmp.eq.s32.totalorder %s21, 0
      %p194 = por %p192, %p193
      %p195 = scmp.ne.s32.totalorder %s181, %s182
      %p196 = scmp.eq.s32.totalorder %s22, 3
      %p197 = por %p195, %p196
      %p199 = scmp.ne.s32.totalorder %s182, %s198
      %p200 = scmp.eq.s32.totalorder %s22, 0
      %p201 = por %p199, %p200
      %p202 = scmp.le.s32.totalorder 1, %s16
      %p203 = scmp.lt.s32.totalorder %s16, 5
      %p204 = pnand %p202, %p203
      %p205 = pneg %p204
      // Predicated region
      $region9: #{tpu_custom_call.1} parent=5 // pred_check
        _
      $region10: #{tpu_custom_call.1} parent=5 // pred_check_branch
        %207 = sbr.rel (%p204) target = $region12
      $region11: #{tpu_custom_call.1} parent=5 // pred_region
        %s208 = ssub.s32 %s16, 1
        // Predicated region
        $region13: #{tpu_custom_call.1} parent=11 // pred_check
          %p209 = pneg %p63
        $region14: #{tpu_custom_call.1} parent=11 // pred_check_branch
          %211 = sbr.rel (%p209) target = $region16
        $region15: #{tpu_custom_call.1} parent=11 // pred_region
          _
        $region16: #{tpu_custom_call.1} parent=11 // pred_fallthru
          _
        // Predicated region
        $region17: #{tpu_custom_call.1} parent=11 // pred_check
          %p212 = pneg %p84
        $region18: #{tpu_custom_call.1} parent=11 // pred_check_branch
          %214 = sbr.rel (%p212) target = $region20
        $region19: #{tpu_custom_call.1} parent=11 // pred_region
          _
        $region20: #{tpu_custom_call.1} parent=11 // pred_fallthru
          _
        // Predicated region
        $region21: #{tpu_custom_call.1} parent=11 // pred_check
          %p215 = pneg %p105
        $region22: #{tpu_custom_call.1} parent=11 // pred_check_branch
          %217 = sbr.rel (%p215) target = $region24
        $region23: #{tpu_custom_call.1} parent=11 // pred_region
          _
        $region24: #{tpu_custom_call.1} parent=11 // pred_fallthru
          _
        // Predicated region
        $region25: #{tpu_custom_call.1} parent=11 // pred_check
          %p218 = pneg %p126
        $region26: #{tpu_custom_call.1} parent=11 // pred_check_branch
          %220 = sbr.rel (%p218) target = $region28
        $region27: #{tpu_custom_call.1} parent=11 // pred_region
          _
        $region28: #{tpu_custom_call.1} parent=11 // pred_fallthru
          _
        // Predicated region
        $region29: #{tpu_custom_call.1} parent=11 // pred_check
          %p221 = pneg %p147
        $region30: #{tpu_custom_call.1} parent=11 // pred_check_branch
          %223 = sbr.rel (%p221) target = $region32
        $region31: #{tpu_custom_call.1} parent=11 // pred_region
          _
        $region32: #{tpu_custom_call.1} parent=11 // pred_fallthru
          _
        // Predicated region
        $region33: #{tpu_custom_call.1} parent=11 // pred_check
          %p224 = pneg %p168
        $region34: #{tpu_custom_call.1} parent=11 // pred_check_branch
          %226 = sbr.rel (%p224) target = $region36
        $region35: #{tpu_custom_call.1} parent=11 // pred_region
          _
        $region36: #{tpu_custom_call.1} parent=11 // pred_fallthru
          _
      $region12: #{tpu_custom_call.1} parent=5 // pred_fallthru
        _
      %p227 = scmp.lt.s32.totalorder %s16, 4
      // Predicated region
      $region37: #{tpu_custom_call.1} parent=5 // pred_check
        %p228 = pneg %p227
      $region38: #{tpu_custom_call.1} parent=5 // pred_check_branch
        %230 = sbr.rel (%p228) target = $region40
      $region39: #{tpu_custom_call.1} parent=5 // pred_region
        // Predicated region
        $region41: #{tpu_custom_call.1} parent=39 // pred_check
          %p231 = pneg %p36
        $region42: #{tpu_custom_call.1} parent=39 // pred_check_branch
          %233 = sbr.rel (%p231) target = $region44
        $region43: #{tpu_custom_call.1} parent=39 // pred_region
          %s234 = smul.u32 4, %s16
          %p235 = scmp.lt.s32.totalorder %s234, 15
          %s236 = scalar_select %p235, %s234, 15
          %s237 = smul.addr %s236, 8
          %s238 = scalar_lea.vmem %s0, %s237
          %s239 = smul.u32 4, %s16
        $region44: #{tpu_custom_call.1} parent=39 // pred_fallthru
          _
      $region40: #{tpu_custom_call.1} parent=5 // pred_fallthru
        _
      %p240 = scmp.le.s32.totalorder 1, %s16
      %p241 = scmp.lt.s32.totalorder %s16, 5
      %p242 = pnand %p240, %p241
      %p243 = pneg %p242
      // Predicated region
      $region45: #{tpu_custom_call.1} parent=5 // pred_check
        _
      $region46: #{tpu_custom_call.1} parent=5 // pred_check_branch
        %245 = sbr.rel (%p242) target = $region48
      $region47: #{tpu_custom_call.1} parent=5 // pred_region
        %s246 = ssub.s32 %s16, 1
        %s247 = smul.u32 4, %s21
        %p248 = scmp.lt.s32.totalorder %s247, 15
        %s249 = scalar_select %p248, %s247, 15
        %s250 = smul.addr %s249, 8
        %s251 = scalar_lea.vmem %s0, %s250
        %p252 = pneg %p42
        %p253 = pneg %p39
        %p254 = pneg %p63
        %p255 = pneg %p60
        %p256 = pneg %p84
        %p257 = pneg %p81
        %p258 = pneg %p105
        %p259 = pneg %p102
        %p260 = pneg %p126
        %p261 = pneg %p123
        %p262 = pneg %p147
        %p263 = pneg %p144
        %p264 = pneg %p168
        %p265 = pneg %p165
        %p266 = pneg %p194
        %p267 = pneg %p191
        %s268 = sand.u32 %s181, 1
        %s269 = scalar_lea.sflag [#allocation3], %s268
        %s270 = sand.u32 %s181, 1
        %s271 = smul.addr %s270, 32
        %s272 = scalar_lea.vmem [#allocation2], %s271
        %s273 = smul.u32 4, %s21
        %p274 = scmp.lt.s32.totalorder %s273, 15
        %s275 = scalar_select %p274, %s273, 15
        %s276 = smul.addr %s275, 8
        %s277 = scalar_lea.vmem %s0, %s276
        %s278 = smul.u32 4, %s21
        %s279 = smul.u32 4, %s21
        %v280 = vld [vmem:[%s277] sm:$0xff]
        %v281 = vld [vmem:[%s277 + $0x8] sm:$0xff]
        %v282 = vld [vmem:[%s277 + $0x10] sm:$0xff]
        %v283 = vld [vmem:[%s277 + $0x18] sm:$0xff]
        %v284 = vlaneseq
        %v285 = vand.u32 %v284, 127
        %286 = vset.pattern.permute.xlu0 0
        %287 = vperm.xlu0 %286, %v280
        %v288 = vpop.permute.xlu0 %287
        %289 = vset.pattern.permute.xlu0 0
        %290 = vperm.xlu0 %289, %v281
        %v291 = vpop.permute.xlu0 %290
        %292 = vset.pattern.permute.xlu0 0
        %293 = vperm.xlu0 %292, %v282
        %v294 = vpop.permute.xlu0 %293
        %295 = vset.pattern.permute.xlu0 0
        %296 = vperm.xlu0 %295, %v283
        %v297 = vpop.permute.xlu0 %296
        %vm298 = vcmp.eq.s32.totalorder %v285, %v288
        %vm299 = vcmp.eq.s32.totalorder %v285, %v291
        %vm300 = vcmp.eq.s32.totalorder %v285, %v294
        %vm301 = vcmp.eq.s32.totalorder %v285, %v297
        %v302 = vsel %vm298, 1.0, 0.0
        %v303 = vsel %vm299, 1.0, 0.0
        %v304 = vsel %vm300, 1.0, 0.0
        %v305 = vsel %vm301, 1.0, 0.0
        %v306 = vadd.f32 %v302, 0.0
        %v307 = vadd.f32 %v303, 0.0
        %v308 = vadd.f32 %v304, 0.0
        %v309 = vadd.f32 %v305, 0.0
        %v310 = vadd.s32 %v280, 11
        %v311 = vadd.s32 %v281, 11
        %v312 = vadd.s32 %v282, 11
        %v313 = vadd.s32 %v283, 11
        %314 = vset.pattern.permute.xlu0 1
        %315 = vperm.xlu0 %314, %v310
        %v316 = vpop.permute.xlu0 %315
        %317 = vset.pattern.permute.xlu0 1
        %318 = vperm.xlu0 %317, %v311
        %v319 = vpop.permute.xlu0 %318
        %320 = vset.pattern.permute.xlu0 1
        %321 = vperm.xlu0 %320, %v312
        %v322 = vpop.permute.xlu0 %321
        %323 = vset.pattern.permute.xlu0 1
        %324 = vperm.xlu0 %323, %v313
        %v325 = vpop.permute.xlu0 %324
        %vm326 = vcmp.eq.s32.totalorder %v285, %v316
        %vm327 = vcmp.eq.s32.totalorder %v285, %v319
        %vm328 = vcmp.eq.s32.totalorder %v285, %v322
        %vm329 = vcmp.eq.s32.totalorder %v285, %v325
        %v330 = vsel %vm326, 1.0, 0.0
        %v331 = vsel %vm327, 1.0, 0.0
        %v332 = vsel %vm328, 1.0, 0.0
        %v333 = vsel %vm329, 1.0, 0.0
        %v334 = vadd.f32 %v306, %v330
        %v335 = vadd.f32 %v307, %v331
        %v336 = vadd.f32 %v308, %v332
        %v337 = vadd.f32 %v309, %v333
        %v338 = vadd.s32 %v280, 22
        %v339 = vadd.s32 %v281, 22
        %v340 = vadd.s32 %v282, 22
        %v341 = vadd.s32 %v283, 22
        %342 = vset.pattern.permute.xlu0 2
        %343 = vperm.xlu0 %342, %v338
        %v344 = vpop.permute.xlu0 %343
        %345 = vset.pattern.permute.xlu0 2
        %346 = vperm.xlu0 %345, %v339
        %v347 = vpop.permute.xlu0 %346
        %348 = vset.pattern.permute.xlu0 2
        %349 = vperm.xlu0 %348, %v340
        %v350 = vpop.permute.xlu0 %349
        %351 = vset.pattern.permute.xlu0 2
        %352 = vperm.xlu0 %351, %v341
        %v353 = vpop.permute.xlu0 %352
        %vm354 = vcmp.eq.s32.totalorder %v285, %v344
        %vm355 = vcmp.eq.s32.totalorder %v285, %v347
        %vm356 = vcmp.eq.s32.totalorder %v285, %v350
        %vm357 = vcmp.eq.s32.totalorder %v285, %v353
        %v358 = vsel %vm354, 1.0, 0.0
        %v359 = vsel %vm355, 1.0, 0.0
        %v360 = vsel %vm356, 1.0, 0.0
        %v361 = vsel %vm357, 1.0, 0.0
        %v362 = vadd.f32 %v334, %v358
        %v363 = vadd.f32 %v335, %v359
        %v364 = vadd.f32 %v336, %v360
        %v365 = vadd.f32 %v337, %v361
        %v366 = vadd.s32 %v280, 33
        %v367 = vadd.s32 %v281, 33
        %v368 = vadd.s32 %v282, 33
        %v369 = vadd.s32 %v283, 33
        %370 = vset.pattern.permute.xlu0 3
        %371 = vperm.xlu0 %370, %v366
        %v372 = vpop.permute.xlu0 %371
        %373 = vset.pattern.permute.xlu0 3
        %374 = vperm.xlu0 %373, %v367
        %v375 = vpop.permute.xlu0 %374
        %376 = vset.pattern.permute.xlu0 3
        %377 = vperm.xlu0 %376, %v368
        %v378 = vpop.permute.xlu0 %377
        %379 = vset.pattern.permute.xlu0 3
        %380 = vperm.xlu0 %379, %v369
        %v381 = vpop.permute.xlu0 %380
        %vm382 = vcmp.eq.s32.totalorder %v285, %v372
        %vm383 = vcmp.eq.s32.totalorder %v285, %v375
        %vm384 = vcmp.eq.s32.totalorder %v285, %v378
        %vm385 = vcmp.eq.s32.totalorder %v285, %v381
        %v386 = vsel %vm382, 1.0, 0.0
        %v387 = vsel %vm383, 1.0, 0.0
        %v388 = vsel %vm384, 1.0, 0.0
        %v389 = vsel %vm385, 1.0, 0.0
        %v390 = vadd.f32 %v362, %v386
        %v391 = vadd.f32 %v363, %v387
        %v392 = vadd.f32 %v364, %v388
        %v393 = vadd.f32 %v365, %v389
        %v394 = vadd.s32 %v280, 44
        %v395 = vadd.s32 %v281, 44
        %v396 = vadd.s32 %v282, 44
        %v397 = vadd.s32 %v283, 44
        %398 = vset.pattern.permute.xlu0 4
        %399 = vperm.xlu0 %398, %v394
        %v400 = vpop.permute.xlu0 %399
        %401 = vset.pattern.permute.xlu0 4
        %402 = vperm.xlu0 %401, %v395
        %v403 = vpop.permute.xlu0 %402
        %404 = vset.pattern.permute.xlu0 4
        %405 = vperm.xlu0 %404, %v396
        %v406 = vpop.permute.xlu0 %405
        %407 = vset.pattern.permute.xlu0 4
        %408 = vperm.xlu0 %407, %v397
        %v409 = vpop.permute.xlu0 %408
        %vm410 = vcmp.eq.s32.totalorder %v285, %v400
        %vm411 = vcmp.eq.s32.totalorder %v285, %v403
        %vm412 = vcmp.eq.s32.totalorder %v285, %v406
        %vm413 = vcmp.eq.s32.totalorder %v285, %v409
        %v414 = vsel %vm410, 1.0, 0.0
        %v415 = vsel %vm411, 1.0, 0.0
        %v416 = vsel %vm412, 1.0, 0.0
        %v417 = vsel %vm413, 1.0, 0.0
        %v418 = vadd.f32 %v390, %v414
        %v419 = vadd.f32 %v391, %v415
        %v420 = vadd.f32 %v392, %v416
        %v421 = vadd.f32 %v393, %v417
        %v422 = vadd.s32 %v280, 55
        %v423 = vadd.s32 %v281, 55
        %v424 = vadd.s32 %v282, 55
        %v425 = vadd.s32 %v283, 55
        %426 = vset.pattern.permute.xlu0 5
        %427 = vperm.xlu0 %426, %v422
        %v428 = vpop.permute.xlu0 %427
        %429 = vset.pattern.permute.xlu0 5
        %430 = vperm.xlu0 %429, %v423
        %v431 = vpop.permute.xlu0 %430
        %432 = vset.pattern.permute.xlu0 5
        %433 = vperm.xlu0 %432, %v424
        %v434 = vpop.permute.xlu0 %433
        %435 = vset.pattern.permute.xlu0 5
        %436 = vperm.xlu0 %435, %v425
        %v437 = vpop.permute.xlu0 %436
        %vm438 = vcmp.eq.s32.totalorder %v285, %v428
        %vm439 = vcmp.eq.s32.totalorder %v285, %v431
        %vm440 = vcmp.eq.s32.totalorder %v285, %v434
        %vm441 = vcmp.eq.s32.totalorder %v285, %v437
        %v442 = vsel %vm438, 1.0, 0.0
        %v443 = vsel %vm439, 1.0, 0.0
        %v444 = vsel %vm440, 1.0, 0.0
        %v445 = vsel %vm441, 1.0, 0.0
        %v446 = vadd.f32 %v418, %v442
        %v447 = vadd.f32 %v419, %v443
        %v448 = vadd.f32 %v420, %v444
        %v449 = vadd.f32 %v421, %v445
        %v450 = vadd.s32 %v280, 66
        %v451 = vadd.s32 %v281, 66
        %v452 = vadd.s32 %v282, 66
        %v453 = vadd.s32 %v283, 66
        %454 = vset.pattern.permute.xlu0 6
        %455 = vperm.xlu0 %454, %v450
        %v456 = vpop.permute.xlu0 %455
        %457 = vset.pattern.permute.xlu0 6
        %458 = vperm.xlu0 %457, %v451
        %v459 = vpop.permute.xlu0 %458
        %460 = vset.pattern.permute.xlu0 6
        %461 = vperm.xlu0 %460, %v452
        %v462 = vpop.permute.xlu0 %461
        %463 = vset.pattern.permute.xlu0 6
        %464 = vperm.xlu0 %463, %v453
        %v465 = vpop.permute.xlu0 %464
        %vm466 = vcmp.eq.s32.totalorder %v285, %v456
        %vm467 = vcmp.eq.s32.totalorder %v285, %v459
        %vm468 = vcmp.eq.s32.totalorder %v285, %v462
        %vm469 = vcmp.eq.s32.totalorder %v285, %v465
        %v470 = vsel %vm466, 1.0, 0.0
        %v471 = vsel %vm467, 1.0, 0.0
        %v472 = vsel %vm468, 1.0, 0.0
        %v473 = vsel %vm469, 1.0, 0.0
        %v474 = vadd.f32 %v446, %v470
        %v475 = vadd.f32 %v447, %v471
        %v476 = vadd.f32 %v448, %v472
        %v477 = vadd.f32 %v449, %v473
        %v478 = vadd.s32 %v280, 77
        %v479 = vadd.s32 %v281, 77
        %v480 = vadd.s32 %v282, 77
        %v481 = vadd.s32 %v283, 77
        %482 = vset.pattern.permute.xlu0 7
        %483 = vperm.xlu0 %482, %v478
        %v484 = vpop.permute.xlu0 %483
        %485 = vset.pattern.permute.xlu0 7
        %486 = vperm.xlu0 %485, %v479
        %v487 = vpop.permute.xlu0 %486
        %488 = vset.pattern.permute.xlu0 7
        %489 = vperm.xlu0 %488, %v480
        %v490 = vpop.permute.xlu0 %489
        %491 = vset.pattern.permute.xlu0 7
        %492 = vperm.xlu0 %491, %v481
        %v493 = vpop.permute.xlu0 %492
        %vm494 = vcmp.eq.s32.totalorder %v285, %v484
        %vm495 = vcmp.eq.s32.totalorder %v285, %v487
        %vm496 = vcmp.eq.s32.totalorder %v285, %v490
        %vm497 = vcmp.eq.s32.totalorder %v285, %v493
        %v498 = vsel %vm494, 1.0, 0.0
        %v499 = vsel %vm495, 1.0, 0.0
        %v500 = vsel %vm496, 1.0, 0.0
        %v501 = vsel %vm497, 1.0, 0.0
        %v502 = vadd.f32 %v474, %v498
        %v503 = vadd.f32 %v475, %v499
        %v504 = vadd.f32 %v476, %v500
        %v505 = vadd.f32 %v477, %v501
        %v506 = vld [vmem:[%s1] sm:$0xff]
        %v507 = vld [vmem:[%s1 + $0x8] sm:$0xff]
        %v508 = vld [vmem:[%s1 + $0x10] sm:$0xff]
        %v509 = vld [vmem:[%s1 + $0x18] sm:$0xff]
        %v510 = vld [vmem:[%s1 + $0x20] sm:$0xff]
        %v511 = vld [vmem:[%s1 + $0x28] sm:$0xff]
        %v512 = vld [vmem:[%s1 + $0x30] sm:$0xff]
        %v513 = vld [vmem:[%s1 + $0x38] sm:$0xff]
        %v514 = vld [vmem:[%s1 + $0x40] sm:$0xff]
        %v515 = vld [vmem:[%s1 + $0x48] sm:$0xff]
        %v516 = vld [vmem:[%s1 + $0x50] sm:$0xff]
        %v517 = vld [vmem:[%s2] sm:$0x1]
        %v519 = vperm.slane %v517, 0
        %vm521 = vcmask 719872
        %v523 = vsel %vm521, %v502, 0
        %v526 = vsel %vm521, %v503, 0
        %v529 = vsel %vm521, %v504, 0
        %v532 = vsel %vm521, %v505, 0
        %534 = vmatpush.msra.mxu0 0.0
        %535 = vmatpush.msra.mxu0 0.0
        %536 = vmatpush.msra.mxu0 0.0
        %537 = vmatpush.msra.mxu0 0.0
        %538 = vmatpush.msra.mxu0 0.0
        %539 = vmatpush.msra.mxu0 %v516
        %540 = vmatpush.msra.mxu0 %v515
        %541 = vmatpush.msra.mxu0 %v514
        %542 = vmatpush.msra.mxu0 %v513
        %543 = vmatpush.msra.mxu0 %v512
        %544 = vmatpush.msra.mxu0 %v511
        %545 = vmatpush.msra.mxu0 %v510
        %546 = vmatpush.msra.mxu0 %v509
        %547 = vmatpush.msra.mxu0 %v508
        %548 = vmatpush.msra.mxu0 %v507
        %549 = vmatpush.msra.mxu0 %v506
        %550 = vmatmul.f32.gmra.mxu0 %v523
        %v551 = vpop.f32.mrf.mxu0
        %v552 = vadd.f32 %v519, %v551
        %553 = vmatmul.f32.gmra.mxu0 %v526
        %v554 = vpop.f32.mrf.mxu0
        %v555 = vadd.f32 %v519, %v554
        %556 = vmatmul.f32.gmra.mxu0 %v529
        %v557 = vpop.f32.mrf.mxu0
        %v558 = vadd.f32 %v519, %v557
        %559 = vmatmul.f32.gmra.mxu0 %v532
        %v560 = vpop.f32.mrf.mxu0
        %v561 = vadd.f32 %v519, %v560
        %562 = vdwg.mxu0
        %v563 = vmax.f32 %v552, 0.0
        %v564 = vmax.f32 %v555, 0.0
        %v565 = vmax.f32 %v558, 0.0
        %v566 = vmax.f32 %v561, 0.0
        %v567 = vld [vmem:[%s3] sm:$0xff]
        %v568 = vld [vmem:[%s3 + $0x8] sm:$0xff]
        %v569 = vld [vmem:[%s3 + $0x10] sm:$0xff]
        %v570 = vld [vmem:[%s3 + $0x18] sm:$0xff]
        %v571 = vld [vmem:[%s4] sm:$0x1]
        %v573 = vperm.slane %v571, 0
        %vm575 = vcmask 261120
        %v577 = vsel %vm575, %v563, 0
        %v580 = vsel %vm575, %v564, 0
        %v583 = vsel %vm575, %v565, 0
        %v586 = vsel %vm575, %v566, 0
        %588 = vmatpush.msra.mxu0 0.0
        %589 = vmatpush.msra.mxu0 0.0
        %590 = vmatpush.msra.mxu0 0.0
        %591 = vmatpush.msra.mxu0 0.0
        %592 = vmatpush.msra.mxu0 0.0
        %593 = vmatpush.msra.mxu0 0.0
        %594 = vmatpush.msra.mxu0 0.0
        %595 = vmatpush.msra.mxu0 0.0
        %596 = vmatpush.msra.mxu0 0.0
        %597 = vmatpush.msra.mxu0 0.0
        %598 = vmatpush.msra.mxu0 0.0
        %599 = vmatpush.msra.mxu0 0.0
        %600 = vmatpush.msra.mxu0 %v570
        %601 = vmatpush.msra.mxu0 %v569
        %602 = vmatpush.msra.mxu0 %v568
        %603 = vmatpush.msra.mxu0 %v567
        %604 = vmatmul.f32.gmra.mxu0 %v577
        %v605 = vpop.f32.mrf.mxu0
        %v606 = vadd.f32 %v573, %v605
        %607 = vmatmul.f32.gmra.mxu0 %v580
        %v608 = vpop.f32.mrf.mxu0
        %v609 = vadd.f32 %v573, %v608
        %610 = vmatmul.f32.gmra.mxu0 %v583
        %v611 = vpop.f32.mrf.mxu0
        %v612 = vadd.f32 %v573, %v611
        %613 = vmatmul.f32.gmra.mxu0 %v586
        %v614 = vpop.f32.mrf.mxu0
        %v615 = vadd.f32 %v573, %v614
        %616 = vdwg.mxu0
        %v617 = vmax.f32 %v606, 0.0
        %v618 = vmax.f32 %v609, 0.0
        %v619 = vmax.f32 %v612, 0.0
        %v620 = vmax.f32 %v615, 0.0
        %v621 = vld [vmem:[%s5] sm:$0xff]
        %v622 = vld [vmem:[%s5 + $0x8] sm:$0xff]
        %v623 = vld [vmem:[%s5 + $0x10] sm:$0xff]
        %v624 = vld [vmem:[%s5 + $0x18] sm:$0xff]
        %v625 = vld [vmem:[%s6] sm:$0x1]
        %v627 = vperm.slane %v625, 0
        %v630 = vsel %vm575, %v617, 0
        %v633 = vsel %vm575, %v618, 0
        %v636 = vsel %vm575, %v619, 0
        %v639 = vsel %vm575, %v620, 0
        %641 = vmatpush.msra.mxu0 0.0
        %642 = vmatpush.msra.mxu0 0.0
        %643 = vmatpush.msra.mxu0 0.0
        %644 = vmatpush.msra.mxu0 0.0
        %645 = vmatpush.msra.mxu0 0.0
        %646 = vmatpush.msra.mxu0 0.0
        %647 = vmatpush.msra.mxu0 0.0
        %648 = vmatpush.msra.mxu0 0.0
        %649 = vmatpush.msra.mxu0 0.0
        %650 = vmatpush.msra.mxu0 0.0
        %651 = vmatpush.msra.mxu0 0.0
        %652 = vmatpush.msra.mxu0 0.0
        %653 = vmatpush.msra.mxu0 %v624
        %654 = vmatpush.msra.mxu0 %v623
        %655 = vmatpush.msra.mxu0 %v622
        %656 = vmatpush.msra.mxu0 %v621
        %657 = vmatmul.f32.gmra.mxu0 %v630
        %v658 = vpop.f32.mrf.mxu0
        %v659 = vadd.f32 %v627, %v658
        %660 = vmatmul.f32.gmra.mxu0 %v633
        %v661 = vpop.f32.mrf.mxu0
        %v662 = vadd.f32 %v627, %v661
        %663 = vmatmul.f32.gmra.mxu0 %v636
        %v664 = vpop.f32.mrf.mxu0
        %v665 = vadd.f32 %v627, %v664
        %666 = vmatmul.f32.gmra.mxu0 %v639
        %v667 = vpop.f32.mrf.mxu0
        %v668 = vadd.f32 %v627, %v667
        %669 = vdwg.mxu0
        %v670 = vsub.f32 0.0, %v659
        %v671 = vsub.f32 0.0, %v662
        %v672 = vsub.f32 0.0, %v665
        %v673 = vsub.f32 0.0, %v668
        %v674 = vmul.f32 %v670, 1.442695
        %v675 = vpow.pop %v674
        %v676 = vmul.f32 %v671, 1.442695
        %v677 = vpow.pop %v676
        %v678 = vmul.f32 %v672, 1.442695
        %v679 = vpow.pop %v678
        %v680 = vmul.f32 %v673, 1.442695
        %v681 = vpow.pop %v680
        %v682 = vadd.f32 %v675, 1.0
        %v683 = vadd.f32 %v677, 1.0
        %v684 = vadd.f32 %v679, 1.0
        %v685 = vadd.f32 %v681, 1.0
        %v686 = vrcp.pop %v682
        %v687 = vrcp.pop %v683
        %v688 = vrcp.pop %v684
        %v689 = vrcp.pop %v685
        %690 = vst [vmem:[%s272] sm:$0xff] %v686
        %691 = vst [vmem:[%s272 + $0x8] sm:$0xff] %v687
        %692 = vst [vmem:[%s272 + $0x10] sm:$0xff] %v688
        %693 = vst [vmem:[%s272 + $0x18] sm:$0xff] %v689
        %s694 = sand.u32 %s181, 1
        %s695 = scalar_lea.sflag [#allocation3], %s694
        %s696 = sand.u32 %s181, 1
        %s697 = smul.addr %s696, 32
        %s698 = scalar_lea.vmem [#allocation2], %s697
        // Predicated region
        $region49: #{tpu_custom_call.1} parent=47 // pred_check
          %p699 = pneg %p191
        $region50: #{tpu_custom_call.1} parent=47 // pred_check_branch
          %701 = sbr.rel (%p699) target = $region52
        $region51: #{tpu_custom_call.1} parent=47 // pred_region
          %s702 = smul.u32 4, %s21
          %704 = vsyncadd %s695, 0
          %s705 = smul.addr %s702, 8
          %s706 = scalar_lea.hbm %s7, %s705
          %s707 = sshll.u32 %s698, 4
          %s708 = int_to_ptr.vmem [resolvable:$true] %s707
          %s709 = sshll.u32 %s706, 4
          %s710 = int_to_ptr.hbm [resolvable:$true] %s709
          %715 = dma.vmem_to_hbm [thread:$0]  %s708, 512, %s710, %s695, 128, 128, 8
        $region52: #{tpu_custom_call.1} parent=47 // pred_fallthru
          _
      $region48: #{tpu_custom_call.1} parent=5 // pred_fallthru
        _
      %p716 = scmp.le.s32.totalorder 2, %s16
      // Predicated region
      $region53: #{tpu_custom_call.1} parent=5 // pred_check
        %p717 = pneg %p716
      $region54: #{tpu_custom_call.1} parent=5 // pred_check_branch
        %719 = sbr.rel (%p717) target = $region56
      $region55: #{tpu_custom_call.1} parent=5 // pred_region
        %s720 = ssub.s32 %s16, 2
        // Predicated region
        $region57: #{tpu_custom_call.1} parent=55 // pred_check
          %p721 = pneg %p197
        $region58: #{tpu_custom_call.1} parent=55 // pred_check_branch
          %723 = sbr.rel (%p721) target = $region60
        $region59: #{tpu_custom_call.1} parent=55 // pred_region
          %s724 = sand.u32 %s182, 1
          %s725 = scalar_lea.sflag [#allocation3], %s724
          %s726 = sand.u32 %s182, 1
          %s727 = smul.addr %s726, 32
          %s728 = scalar_lea.vmem [#allocation2], %s727
          %730 = dma.done %s725, 512
        $region60: #{tpu_custom_call.1} parent=55 // pred_fallthru
          _
      $region56: #{tpu_custom_call.1} parent=5 // pred_fallthru
        _
    $region6: #{tpu_custom_call.1} parent=1 // loop_footer
      %s20 = sadd.s32 1, %s16
    $region7: #{tpu_custom_call.1} parent=1 // loop_footer_branch
      %15 = sbr.rel target = $region3
    $region8: #{tpu_custom_call.1} parent=1 // loop_exit
      _
    %731 = vsyncpa [#allocation3], 1
    %s732 = scalar_lea.sflag [#allocation3], 1
    %733 = vsyncpa %s732, 1

</llo_original>
